<compile_context>
chip_gen: v7x
topology: tpu7x:2x2x1
jax: 0.10.0
libtpu: 0.0.40
codegen_flags: <defaults>
</compile_context>

<pallas_src>
import functools

import jax
import jax.numpy as jnp
from jax import lax
from jax.experimental import pallas as pl
from jax.experimental.pallas import tpu as pltpu


def _conv2df_kernel(x_ref, w_ref, b_ref, o_ref, col_ref, *,
                    H, W, KH, KW, apply_relu, neg_slope):
    # x_ref:   (1, Cin, H*W)       one batch element, spatially flattened NCHW
    # w_ref:   (Cout, KH*KW*Cin)   weight rows ordered (kh, kw) tap-major, ci minor
    # b_ref:   (Cout, 1)           bias
    # o_ref:   (1, Cout, H*W)      full-grid ("same"-style) output, lane-dense
    # col_ref: VMEM (KH*KW*Cin, H*W) im2col scratch
    Cin = x_ref.shape[1]
    HW = H * W
    ch, cw = (KH - 1) // 2, (KW - 1) // 2

    x = x_ref[0]                                          # (Cin, HW)
    p = lax.broadcasted_iota(jnp.int32, (Cin, HW), 1)     # flat output index
    pw = p % W                                            # output column index

    # Build the im2col operand: each tap is a circular lane roll (XLU slot,
    # otherwise idle here) plus a compile-time-constant boundary mask (VPU
    # select).  The masked wrap lanes implement the zero padding, so no padded
    # copy of the input is ever materialized.
    for kh in range(KH):
        for kw in range(KW):
            t = kh * KW + kw
            dw = kw - cw
            s = (kh - ch) * W + dw                        # flat source shift
            if s == 0 and dw == 0:                        # center tap
                col_ref[t * Cin:(t + 1) * Cin, :] = x
                continue
            tap = x if s == 0 else pltpu.roll(x, shift=(-s) % HW, axis=1)
            valid = (p + s >= 0) & (p + s < HW)           # top/bottom rows
            if dw < 0:
                valid = valid & (pw >= -dw)               # left columns
            elif dw > 0:
                valid = valid & (pw < W - dw)             # right columns
            col_ref[t * Cin:(t + 1) * Cin, :] = jnp.where(
                valid, tap, jnp.zeros_like(tap))

    # One fused matmul over all taps: (Cout, 36) @ (36, 256), f32 accumulate.
    acc = jnp.dot(w_ref[...], col_ref[...],
                  preferred_element_type=jnp.float32)
    acc = acc + b_ref[...].astype(jnp.float32)            # (Cout, 1) broadcast
    if apply_relu:
        acc = jnp.where(acc >= 0, acc, neg_slope * acc)   # leaky_relu
    o_ref[0, ...] = acc.astype(o_ref.dtype)


def conv2df_forward(x_nchw, weight_oihw, bias, *, stride=1, same_padding=False,
                    relu=True, neg_slope=0.01, compute_dtype=jnp.float32):
    """Forward pass of Conv2df (bn=False path) using a Pallas TPU kernel."""
    assert stride == 1, "kernel implemented for stride=1"
    # TODO(synk): BatchNorm2d (bn=True, training-mode batch statistics) is not
    # fused; it needs a cross-batch reduction pass with a different grid.
    N, Cin, H, W = x_nchw.shape
    Cout, _, KH, KW = weight_oihw.shape
    if same_padding:
        assert KH % 2 == 1 and KW % 2 == 1, "same padding needs odd kernel"

    HW = H * W
    out_dtype = x_nchw.dtype

    # Free / tiny layout glue only (no transposes, no jnp.pad of the image).
    x_flat = x_nchw.reshape(N, Cin, HW).astype(compute_dtype)
    w2d = jnp.transpose(weight_oihw, (0, 2, 3, 1)).reshape(
        Cout, KH * KW * Cin).astype(compute_dtype)        # tap-major rows
    b2 = bias.reshape(Cout, 1).astype(jnp.float32)

    kernel = functools.partial(_conv2df_kernel, H=H, W=W, KH=KH, KW=KW,
                               apply_relu=relu, neg_slope=neg_slope)

    out_full = pl.pallas_call(
        kernel,
        out_shape=jax.ShapeDtypeStruct((N, Cout, HW), out_dtype),
        grid_spec=pltpu.PrefetchScalarGridSpec(
            num_scalar_prefetch=0,
            grid=(N,),
            in_specs=[
                pl.BlockSpec((1, Cin, HW), lambda n: (n, 0, 0)),
                pl.BlockSpec((Cout, KH * KW * Cin), lambda n: (0, 0)),
                pl.BlockSpec((Cout, 1), lambda n: (0, 0)),
            ],
            out_specs=pl.BlockSpec((1, Cout, HW), lambda n: (n, 0, 0)),
            scratch_shapes=[pltpu.VMEM((KH * KW * Cin, HW), compute_dtype)],
        ),
        compiler_params=pltpu.CompilerParams(
            dimension_semantics=("parallel",)),              # 2 TCs on v7x
    )(x_flat, w2d, b2)

    out_full = out_full.reshape(N, Cout, H, W)               # free reshape
    if same_padding:
        return out_full
    # Valid (pad=0) conv is the centered crop of the full-grid result; the
    # cropped positions never touch the masked (zero-padded) lanes.
    OH, OW = H - KH + 1, W - KW + 1
    return out_full[:, :, (KH - 1) // 2:(KH - 1) // 2 + OH,
                    (KW - 1) // 2:(KW - 1) // 2 + OW]


def _reference(x_nchw, weight_oihw, bias, *, same_padding, relu, neg_slope=0.01):
    pad_h = (weight_oihw.shape[2] - 1) // 2 if same_padding else 0
    pad_w = (weight_oihw.shape[3] - 1) // 2 if same_padding else 0
    y = lax.conv_general_dilated(
        x_nchw.astype(jnp.float32), weight_oihw.astype(jnp.float32),
        window_strides=(1, 1), padding=[(pad_h, pad_h), (pad_w, pad_w)],
        dimension_numbers=("NCHW", "OIHW", "NCHW"))
    y = y + bias.reshape(1, -1, 1, 1)
    if relu:
        y = jnp.where(y >= 0, y, neg_slope * y)
    return y


if __name__ == "__main__":
    # Module config: Conv2df(in_channels=4, out_channels=8, kernel_size=3,
    #                        stride=1, relu=True, same_padding=True, bn=False)
    in_channels, out_channels, kernel_size = 4, 8, 3
    N, H, W = 2, 16, 16

    key = jax.random.PRNGKey(0)
    kx, k_w, k_b = jax.random.split(key, 3)
    x = jax.random.normal(kx, (N, in_channels, H, W), jnp.float32)
    # Deterministic, PyTorch-shaped parameters (OIHW weight, (Cout,) bias).
    fan_in = in_channels * kernel_size * kernel_size
    bound = 1.0 / (fan_in ** 0.5)
    weight = jax.random.uniform(
        k_w, (out_channels, in_channels, kernel_size, kernel_size),
        jnp.float32, -bound, bound)
    bias = jax.random.uniform(k_b, (out_channels,), jnp.float32, -bound, bound)

    # same_padding=True path (the tested module configuration).
    out = conv2df_forward(x, weight, bias, stride=1, same_padding=True,
                          relu=True)
    out = jax.block_until_ready(out)
    ref = _reference(x, weight, bias, same_padding=True, relu=True)
    assert out.shape == (N, out_channels, H, W), out.shape
    assert jnp.allclose(out, ref, atol=1e-4, rtol=1e-4), float(
        jnp.max(jnp.abs(out - ref)))

    # same_padding=False (module default) uses the same kernel + a crop.
    out_v = conv2df_forward(x, weight, bias, stride=1, same_padding=False,
                            relu=True)
    out_v = jax.block_until_ready(out_v)
    ref_v = _reference(x, weight, bias, same_padding=False, relu=True)
    assert out_v.shape == ref_v.shape, (out_v.shape, ref_v.shape)
    assert jnp.allclose(out_v, ref_v, atol=1e-4, rtol=1e-4), float(
        jnp.max(jnp.abs(out_v - ref_v)))

    print("KERNEL_OK")
</pallas_src>

<mosaic_0001>
module attributes {stable_mosaic.version = 11 : i64} {
  func.func @_conv2df_kernel(%arg0: i32, %arg1: memref<1x4x256xf32, #tpu.memory_space<vmem>>, %arg2: memref<8x36xf32, #tpu.memory_space<vmem>>, %arg3: memref<8x1xf32, #tpu.memory_space<vmem>>, %arg4: memref<1x8x256xf32, #tpu.memory_space<vmem>>, %arg5: memref<36x256xf32, #tpu.memory_space<vmem>>) attributes {dimension_semantics = [#tpu.dimension_semantics<parallel>], iteration_bounds = array<i64: 2>, scalar_prefetch = 0 : i64, scratch_operands = 1 : i64, tpu.core_type = #tpu.core_type<tc>, window_params = [{transform_indices = @transform_0, window_bounds = array<i64: 1, 4, 256>}, {pipeline_mode = #tpu.pipeline_mode<synchronous>, transform_indices = @transform_1, window_bounds = array<i64: 8, 36>}, {pipeline_mode = #tpu.pipeline_mode<synchronous>, transform_indices = @transform_2, window_bounds = array<i64: 8, 1>}, {transform_indices = @transform_3, window_bounds = array<i64: 1, 8, 256>}]} {
    %c0 = arith.constant 0 : index
    %c0_0 = arith.constant 0 : index
    %c0_1 = arith.constant 0 : index
    %0 = vector.load %arg1[%c0, %c0_0, %c0_1] : memref<1x4x256xf32, #tpu.memory_space<vmem>>, vector<1x4x256xf32>
    %1 = vector.shape_cast %0 : vector<1x4x256xf32> to vector<4x256xf32>
    %2 = tpu.iota {dimensions = array<i32: 1>} : vector<4x256xi32>
    %c16_i32 = arith.constant 16 : i32
    %c0_i32 = arith.constant 0 : i32
    %3 = arith.cmpi eq, %c16_i32, %c0_i32 : i32
    %c1_i32 = arith.constant 1 : i32
    %4 = arith.select %3, %c1_i32, %c16_i32 : i32
    %5 = vector.broadcast %4 : i32 to vector<4x256xi32>
    %6 = arith.remsi %2, %5 : vector<4x256xi32>
    %c0_i32_2 = arith.constant 0 : i32
    %7 = vector.broadcast %c0_i32_2 : i32 to vector<4x256xi32>
    %8 = arith.cmpi ne, %6, %7 : vector<4x256xi32>
    %c0_i32_3 = arith.constant 0 : i32
    %9 = vector.broadcast %c0_i32_3 : i32 to vector<4x256xi32>
    %10 = arith.cmpi slt, %6, %9 : vector<4x256xi32>
    %c0_i32_4 = arith.constant 0 : i32
    %11 = arith.cmpi slt, %4, %c0_i32_4 : i32
    %12 = vector.broadcast %11 : i1 to vector<4x256xi1>
    %13 = vector.broadcast %12 : vector<4x256xi1> to vector<4x256xi1>
    %14 = arith.xori %10, %13 : vector<4x256xi1>
    %15 = arith.andi %14, %8 : vector<4x256xi1>
    %16 = vector.broadcast %4 : i32 to vector<4x256xi32>
    %17 = arith.addi %6, %16 : vector<4x256xi32>
    %18 = arith.select %15, %17, %6 : vector<4x256xi1>, vector<4x256xi32>
    %c17_i32 = arith.constant 17 : i32
    %19 = tpu.dynamic_rotate %1 by %c17_i32 dim 1 : vector<4x256xf32>, i32 -> vector<4x256xf32>
    %c-17_i32 = arith.constant -17 : i32
    %20 = vector.broadcast %c-17_i32 : i32 to vector<4x256xi32>
    %21 = arith.addi %2, %20 : vector<4x256xi32>
    %c0_i32_5 = arith.constant 0 : i32
    %22 = vector.broadcast %c0_i32_5 : i32 to vector<4x256xi32>
    %23 = arith.cmpi sge, %21, %22 : vector<4x256xi32>
    %c-17_i32_6 = arith.constant -17 : i32
    %24 = vector.broadcast %c-17_i32_6 : i32 to vector<4x256xi32>
    %25 = arith.addi %2, %24 : vector<4x256xi32>
    %c256_i32 = arith.constant 256 : i32
    %26 = vector.broadcast %c256_i32 : i32 to vector<4x256xi32>
    %27 = arith.cmpi slt, %25, %26 : vector<4x256xi32>
    %28 = arith.andi %23, %27 : vector<4x256xi1>
    %c1_i32_7 = arith.constant 1 : i32
    %29 = vector.broadcast %c1_i32_7 : i32 to vector<4x256xi32>
    %30 = arith.cmpi sge, %18, %29 : vector<4x256xi32>
    %31 = arith.andi %28, %30 : vector<4x256xi1>
    %cst = arith.constant 0.000000e+00 : f32
    %32 = vector.broadcast %cst : f32 to vector<4x256xf32>
    %33 = arith.select %31, %19, %32 : vector<4x256xi1>, vector<4x256xf32>
    %c0_8 = arith.constant 0 : index
    %c0_9 = arith.constant 0 : index
    %34 = vector.load %arg5[%c0_8, %c0_9] : memref<36x256xf32, #tpu.memory_space<vmem>>, vector<4x256xf32>
    tpu.vector_store %arg5[%c0_8, %c0_9], %33 {strides = array<i32>} : memref<36x256xf32, #tpu.memory_space<vmem>>, vector<4x256xf32>,
    %c16_i32_10 = arith.constant 16 : i32
    %35 = tpu.dynamic_rotate %1 by %c16_i32_10 dim 1 : vector<4x256xf32>, i32 -> vector<4x256xf32>
    %c-16_i32 = arith.constant -16 : i32
    %36 = vector.broadcast %c-16_i32 : i32 to vector<4x256xi32>
    %37 = arith.addi %2, %36 : vector<4x256xi32>
    %c0_i32_11 = arith.constant 0 : i32
    %38 = vector.broadcast %c0_i32_11 : i32 to vector<4x256xi32>
    %39 = arith.cmpi sge, %37, %38 : vector<4x256xi32>
    %c-16_i32_12 = arith.constant -16 : i32
    %40 = vector.broadcast %c-16_i32_12 : i32 to vector<4x256xi32>
    %41 = arith.addi %2, %40 : vector<4x256xi32>
    %c256_i32_13 = arith.constant 256 : i32
    %42 = vector.broadcast %c256_i32_13 : i32 to vector<4x256xi32>
    %43 = arith.cmpi slt, %41, %42 : vector<4x256xi32>
    %44 = arith.andi %39, %43 : vector<4x256xi1>
    %cst_14 = arith.constant 0.000000e+00 : f32
    %45 = vector.broadcast %cst_14 : f32 to vector<4x256xf32>
    %46 = arith.select %44, %35, %45 : vector<4x256xi1>, vector<4x256xf32>
    %c4 = arith.constant 4 : index
    %c0_15 = arith.constant 0 : index
    %47 = vector.load %arg5[%c4, %c0_15] : memref<36x256xf32, #tpu.memory_space<vmem>>, vector<4x256xf32>
    tpu.vector_store %arg5[%c4, %c0_15], %46 {strides = array<i32>} : memref<36x256xf32, #tpu.memory_space<vmem>>, vector<4x256xf32>,
    %c15_i32 = arith.constant 15 : i32
    %48 = tpu.dynamic_rotate %1 by %c15_i32 dim 1 : vector<4x256xf32>, i32 -> vector<4x256xf32>
    %c-15_i32 = arith.constant -15 : i32
    %49 = vector.broadcast %c-15_i32 : i32 to vector<4x256xi32>
    %50 = arith.addi %2, %49 : vector<4x256xi32>
    %c0_i32_16 = arith.constant 0 : i32
    %51 = vector.broadcast %c0_i32_16 : i32 to vector<4x256xi32>
    %52 = arith.cmpi sge, %50, %51 : vector<4x256xi32>
    %c-15_i32_17 = arith.constant -15 : i32
    %53 = vector.broadcast %c-15_i32_17 : i32 to vector<4x256xi32>
    %54 = arith.addi %2, %53 : vector<4x256xi32>
    %c256_i32_18 = arith.constant 256 : i32
    %55 = vector.broadcast %c256_i32_18 : i32 to vector<4x256xi32>
    %56 = arith.cmpi slt, %54, %55 : vector<4x256xi32>
    %57 = arith.andi %52, %56 : vector<4x256xi1>
    %c15_i32_19 = arith.constant 15 : i32
    %58 = vector.broadcast %c15_i32_19 : i32 to vector<4x256xi32>
    %59 = arith.cmpi slt, %18, %58 : vector<4x256xi32>
    %60 = arith.andi %57, %59 : vector<4x256xi1>
    %cst_20 = arith.constant 0.000000e+00 : f32
    %61 = vector.broadcast %cst_20 : f32 to vector<4x256xf32>
    %62 = arith.select %60, %48, %61 : vector<4x256xi1>, vector<4x256xf32>
    %c8 = arith.constant 8 : index
    %c0_21 = arith.constant 0 : index
    %63 = vector.load %arg5[%c8, %c0_21] : memref<36x256xf32, #tpu.memory_space<vmem>>, vector<4x256xf32>
    tpu.vector_store %arg5[%c8, %c0_21], %62 {strides = array<i32>} : memref<36x256xf32, #tpu.memory_space<vmem>>, vector<4x256xf32>,
    %c1_i32_22 = arith.constant 1 : i32
    %64 = tpu.dynamic_rotate %1 by %c1_i32_22 dim 1 : vector<4x256xf32>, i32 -> vector<4x256xf32>
    %c-1_i32 = arith.constant -1 : i32
    %65 = vector.broadcast %c-1_i32 : i32 to vector<4x256xi32>
    %66 = arith.addi %2, %65 : vector<4x256xi32>
    %c0_i32_23 = arith.constant 0 : i32
    %67 = vector.broadcast %c0_i32_23 : i32 to vector<4x256xi32>
    %68 = arith.cmpi sge, %66, %67 : vector<4x256xi32>
    %c-1_i32_24 = arith.constant -1 : i32
    %69 = vector.broadcast %c-1_i32_24 : i32 to vector<4x256xi32>
    %70 = arith.addi %2, %69 : vector<4x256xi32>
    %c256_i32_25 = arith.constant 256 : i32
    %71 = vector.broadcast %c256_i32_25 : i32 to vector<4x256xi32>
    %72 = arith.cmpi slt, %70, %71 : vector<4x256xi32>
    %73 = arith.andi %68, %72 : vector<4x256xi1>
    %c1_i32_26 = arith.constant 1 : i32
    %74 = vector.broadcast %c1_i32_26 : i32 to vector<4x256xi32>
    %75 = arith.cmpi sge, %18, %74 : vector<4x256xi32>
    %76 = arith.andi %73, %75 : vector<4x256xi1>
    %cst_27 = arith.constant 0.000000e+00 : f32
    %77 = vector.broadcast %cst_27 : f32 to vector<4x256xf32>
    %78 = arith.select %76, %64, %77 : vector<4x256xi1>, vector<4x256xf32>
    %c12 = arith.constant 12 : index
    %c0_28 = arith.constant 0 : index
    %79 = vector.load %arg5[%c12, %c0_28] : memref<36x256xf32, #tpu.memory_space<vmem>>, vector<4x256xf32>
    tpu.vector_store %arg5[%c12, %c0_28], %78 {strides = array<i32>} : memref<36x256xf32, #tpu.memory_space<vmem>>, vector<4x256xf32>,
    %c16 = arith.constant 16 : index
    %c0_29 = arith.constant 0 : index
    %80 = vector.load %arg5[%c16, %c0_29] : memref<36x256xf32, #tpu.memory_space<vmem>>, vector<4x256xf32>
    tpu.vector_store %arg5[%c16, %c0_29], %1 {strides = array<i32>} : memref<36x256xf32, #tpu.memory_space<vmem>>, vector<4x256xf32>,
    %c255_i32 = arith.constant 255 : i32
    %81 = tpu.dynamic_rotate %1 by %c255_i32 dim 1 : vector<4x256xf32>, i32 -> vector<4x256xf32>
    %c1_i32_30 = arith.constant 1 : i32
    %82 = vector.broadcast %c1_i32_30 : i32 to vector<4x256xi32>
    %83 = arith.addi %2, %82 : vector<4x256xi32>
    %c0_i32_31 = arith.constant 0 : i32
    %84 = vector.broadcast %c0_i32_31 : i32 to vector<4x256xi32>
    %85 = arith.cmpi sge, %83, %84 : vector<4x256xi32>
    %c1_i32_32 = arith.constant 1 : i32
    %86 = vector.broadcast %c1_i32_32 : i32 to vector<4x256xi32>
    %87 = arith.addi %2, %86 : vector<4x256xi32>
    %c256_i32_33 = arith.constant 256 : i32
    %88 = vector.broadcast %c256_i32_33 : i32 to vector<4x256xi32>
    %89 = arith.cmpi slt, %87, %88 : vector<4x256xi32>
    %90 = arith.andi %85, %89 : vector<4x256xi1>
    %c15_i32_34 = arith.constant 15 : i32
    %91 = vector.broadcast %c15_i32_34 : i32 to vector<4x256xi32>
    %92 = arith.cmpi slt, %18, %91 : vector<4x256xi32>
    %93 = arith.andi %90, %92 : vector<4x256xi1>
    %cst_35 = arith.constant 0.000000e+00 : f32
    %94 = vector.broadcast %cst_35 : f32 to vector<4x256xf32>
    %95 = arith.select %93, %81, %94 : vector<4x256xi1>, vector<4x256xf32>
    %c20 = arith.constant 20 : index
    %c0_36 = arith.constant 0 : index
    %96 = vector.load %arg5[%c20, %c0_36] : memref<36x256xf32, #tpu.memory_space<vmem>>, vector<4x256xf32>
    tpu.vector_store %arg5[%c20, %c0_36], %95 {strides = array<i32>} : memref<36x256xf32, #tpu.memory_space<vmem>>, vector<4x256xf32>,
    %c241_i32 = arith.constant 241 : i32
    %97 = tpu.dynamic_rotate %1 by %c241_i32 dim 1 : vector<4x256xf32>, i32 -> vector<4x256xf32>
    %c15_i32_37 = arith.constant 15 : i32
    %98 = vector.broadcast %c15_i32_37 : i32 to vector<4x256xi32>
    %99 = arith.addi %2, %98 : vector<4x256xi32>
    %c0_i32_38 = arith.constant 0 : i32
    %100 = vector.broadcast %c0_i32_38 : i32 to vector<4x256xi32>
    %101 = arith.cmpi sge, %99, %100 : vector<4x256xi32>
    %c15_i32_39 = arith.constant 15 : i32
    %102 = vector.broadcast %c15_i32_39 : i32 to vector<4x256xi32>
    %103 = arith.addi %2, %102 : vector<4x256xi32>
    %c256_i32_40 = arith.constant 256 : i32
    %104 = vector.broadcast %c256_i32_40 : i32 to vector<4x256xi32>
    %105 = arith.cmpi slt, %103, %104 : vector<4x256xi32>
    %106 = arith.andi %101, %105 : vector<4x256xi1>
    %c1_i32_41 = arith.constant 1 : i32
    %107 = vector.broadcast %c1_i32_41 : i32 to vector<4x256xi32>
    %108 = arith.cmpi sge, %18, %107 : vector<4x256xi32>
    %109 = arith.andi %106, %108 : vector<4x256xi1>
    %cst_42 = arith.constant 0.000000e+00 : f32
    %110 = vector.broadcast %cst_42 : f32 to vector<4x256xf32>
    %111 = arith.select %109, %97, %110 : vector<4x256xi1>, vector<4x256xf32>
    %c24 = arith.constant 24 : index
    %c0_43 = arith.constant 0 : index
    %112 = vector.load %arg5[%c24, %c0_43] : memref<36x256xf32, #tpu.memory_space<vmem>>, vector<4x256xf32>
    tpu.vector_store %arg5[%c24, %c0_43], %111 {strides = array<i32>} : memref<36x256xf32, #tpu.memory_space<vmem>>, vector<4x256xf32>,
    %c240_i32 = arith.constant 240 : i32
    %113 = tpu.dynamic_rotate %1 by %c240_i32 dim 1 : vector<4x256xf32>, i32 -> vector<4x256xf32>
    %c16_i32_44 = arith.constant 16 : i32
    %114 = vector.broadcast %c16_i32_44 : i32 to vector<4x256xi32>
    %115 = arith.addi %2, %114 : vector<4x256xi32>
    %c0_i32_45 = arith.constant 0 : i32
    %116 = vector.broadcast %c0_i32_45 : i32 to vector<4x256xi32>
    %117 = arith.cmpi sge, %115, %116 : vector<4x256xi32>
    %c16_i32_46 = arith.constant 16 : i32
    %118 = vector.broadcast %c16_i32_46 : i32 to vector<4x256xi32>
    %119 = arith.addi %2, %118 : vector<4x256xi32>
    %c256_i32_47 = arith.constant 256 : i32
    %120 = vector.broadcast %c256_i32_47 : i32 to vector<4x256xi32>
    %121 = arith.cmpi slt, %119, %120 : vector<4x256xi32>
    %122 = arith.andi %117, %121 : vector<4x256xi1>
    %cst_48 = arith.constant 0.000000e+00 : f32
    %123 = vector.broadcast %cst_48 : f32 to vector<4x256xf32>
    %124 = arith.select %122, %113, %123 : vector<4x256xi1>, vector<4x256xf32>
    %c28 = arith.constant 28 : index
    %c0_49 = arith.constant 0 : index
    %125 = vector.load %arg5[%c28, %c0_49] : memref<36x256xf32, #tpu.memory_space<vmem>>, vector<4x256xf32>
    tpu.vector_store %arg5[%c28, %c0_49], %124 {strides = array<i32>} : memref<36x256xf32, #tpu.memory_space<vmem>>, vector<4x256xf32>,
    %c239_i32 = arith.constant 239 : i32
    %126 = tpu.dynamic_rotate %1 by %c239_i32 dim 1 : vector<4x256xf32>, i32 -> vector<4x256xf32>
    %c17_i32_50 = arith.constant 17 : i32
    %127 = vector.broadcast %c17_i32_50 : i32 to vector<4x256xi32>
    %128 = arith.addi %2, %127 : vector<4x256xi32>
    %c0_i32_51 = arith.constant 0 : i32
    %129 = vector.broadcast %c0_i32_51 : i32 to vector<4x256xi32>
    %130 = arith.cmpi sge, %128, %129 : vector<4x256xi32>
    %c17_i32_52 = arith.constant 17 : i32
    %131 = vector.broadcast %c17_i32_52 : i32 to vector<4x256xi32>
    %132 = arith.addi %2, %131 : vector<4x256xi32>
    %c256_i32_53 = arith.constant 256 : i32
    %133 = vector.broadcast %c256_i32_53 : i32 to vector<4x256xi32>
    %134 = arith.cmpi slt, %132, %133 : vector<4x256xi32>
    %135 = arith.andi %130, %134 : vector<4x256xi1>
    %c15_i32_54 = arith.constant 15 : i32
    %136 = vector.broadcast %c15_i32_54 : i32 to vector<4x256xi32>
    %137 = arith.cmpi slt, %18, %136 : vector<4x256xi32>
    %138 = arith.andi %135, %137 : vector<4x256xi1>
    %cst_55 = arith.constant 0.000000e+00 : f32
    %139 = vector.broadcast %cst_55 : f32 to vector<4x256xf32>
    %140 = arith.select %138, %126, %139 : vector<4x256xi1>, vector<4x256xf32>
    %c32 = arith.constant 32 : index
    %c0_56 = arith.constant 0 : index
    %141 = vector.load %arg5[%c32, %c0_56] : memref<36x256xf32, #tpu.memory_space<vmem>>, vector<4x256xf32>
    tpu.vector_store %arg5[%c32, %c0_56], %140 {strides = array<i32>} : memref<36x256xf32, #tpu.memory_space<vmem>>, vector<4x256xf32>,
    %c0_57 = arith.constant 0 : index
    %c0_58 = arith.constant 0 : index
    %142 = vector.load %arg2[%c0_57, %c0_58] : memref<8x36xf32, #tpu.memory_space<vmem>>, vector<8x36xf32>
    %c0_59 = arith.constant 0 : index
    %c0_60 = arith.constant 0 : index
    %143 = vector.load %arg5[%c0_59, %c0_60] : memref<36x256xf32, #tpu.memory_space<vmem>>, vector<36x256xf32>
    %cst_61 = arith.constant dense<0.000000e+00> : vector<8x256xf32>
    %144 = tpu.matmul %142, %143, %cst_61 {dimension_numbers = #tpu.dot_dimension_numbers<[1], [0], [0], [1], [0, 0, 1, 1], [], []>} : vector<8x36xf32>, vector<36x256xf32>, vector<8x256xf32> -> vector<8x256xf32>
    %c0_62 = arith.constant 0 : index
    %c0_63 = arith.constant 0 : index
    %145 = vector.load %arg3[%c0_62, %c0_63] : memref<8x1xf32, #tpu.memory_space<vmem>>, vector<8x1xf32>
    %146 = vector.broadcast %145 : vector<8x1xf32> to vector<8x256xf32>
    %147 = arith.addf %144, %146 : vector<8x256xf32>
    %cst_64 = arith.constant 0.000000e+00 : f32
    %148 = vector.broadcast %cst_64 : f32 to vector<8x256xf32>
    %149 = arith.cmpf oge, %147, %148 : vector<8x256xf32>
    %cst_65 = arith.constant 0.00999999977 : f32
    %150 = vector.broadcast %cst_65 : f32 to vector<8x256xf32>
    %151 = arith.mulf %150, %147 : vector<8x256xf32>
    %152 = arith.select %149, %147, %151 : vector<8x256xi1>, vector<8x256xf32>
    %c0_66 = arith.constant 0 : index
    %c0_67 = arith.constant 0 : index
    %c0_68 = arith.constant 0 : index
    %153 = vector.load %arg4[%c0_66, %c0_67, %c0_68] : memref<1x8x256xf32, #tpu.memory_space<vmem>>, vector<1x8x256xf32>
    %154 = vector.shape_cast %153 : vector<1x8x256xf32> to vector<8x256xf32>
    %155 = vector.shape_cast %152 : vector<8x256xf32> to vector<1x8x256xf32>
    tpu.vector_store %arg4[%c0_66, %c0_67, %c0_68], %155 {strides = array<i32>} : memref<1x8x256xf32, #tpu.memory_space<vmem>>, vector<1x8x256xf32>,
    return
  }
  func.func @transform_0(%arg0: i32) -> (i32, i32, i32) {
    %c0_i32 = arith.constant 0 : i32
    %c0_i32_0 = arith.constant 0 : i32
    %c0_i32_1 = arith.constant 0 : i32
    return %arg0, %c0_i32, %c0_i32_0 : i32, i32, i32
  }
  func.func @transform_1(%arg0: i32) -> (i32, i32) {
    %c0_i32 = arith.constant 0 : i32
    %c0_i32_0 = arith.constant 0 : i32
    %c0_i32_1 = arith.constant 0 : i32
    return %c0_i32, %c0_i32_0 : i32, i32
  }
  func.func @transform_2(%arg0: i32) -> (i32, i32) {
    %c0_i32 = arith.constant 0 : i32
    %c0_i32_0 = arith.constant 0 : i32
    %c0_i32_1 = arith.constant 0 : i32
    return %c0_i32, %c0_i32_0 : i32, i32
  }
  func.func @transform_3(%arg0: i32) -> (i32, i32, i32) {
    %c0_i32 = arith.constant 0 : i32
    %c0_i32_0 = arith.constant 0 : i32
    %c0_i32_1 = arith.constant 0 : i32
    return %arg0, %c0_i32, %c0_i32_0 : i32, i32, i32
  }
}

</mosaic_0001>

<llo_original>
// kernel: tpu_custom_call.1
$region0: #{tpu_custom_call.1}
  #allocation0 [shape = 'u32[]', space=smem, size = 0x4, offset = 0x4, fixed_abs, tag = 'smem constant byte address 0x4 - core index']
  #allocation1 [shape = 'u32[144,128]{1,0:T(1,128)}', space=vmem, size = 0x12000, scoped, tag = 'internal scratch']
  #allocation2 [shape = 'f32[36,256]{1,0:T(8,128)}', space=vmem, size = 0xa000, scoped, tag = 'scratch operand']
  %s0 = inlined_call_operand.hbm [shape: f32[2,4,256], index: 0, kind: input, shape index: {}]
  %s1 = inlined_call_operand.vmem [shape: f32[8,36], index: 1, kind: input, shape index: {}]
  %s2 = inlined_call_operand.vmem [shape: f32[8,1], index: 2, kind: input, shape index: {}]
  %s3 = inlined_call_operand.hbm [shape: f32[2,8,256], index: 3, kind: output, shape index: {}]
  %s4 = sld [smem:[#allocation0]]
  $region49: #{tpu_custom_call.1} parent=0
    _
  %s6 = ssub.s32 1, %s4
  %s7 = scalar_select 0, %s6, %s4
  $region1: #{tpu_custom_call.1} parent=0
    #allocation3 [shape = 'u8[8192]{0}', space=vmem, size = 0x2000, scoped, tag = 'input window, operand 0']
    #allocation4 [shape = 's32[2]{0}', space=sflag, size = 0x8, scoped, tag = 'scoped memory for tpu_custom_call.1']
    #allocation5 [shape = 's32[2]{0}', space=sflag, size = 0x8, scoped, tag = 'scoped memory for tpu_custom_call.1']
    #allocation6 [shape = 'u8[16384]{0}', space=vmem, size = 0x4000, scoped, tag = 'output window, operand 0']
    %8 = vsyncpa [#allocation4], 0
    %s9 = scalar_lea.sflag [#allocation4], 1
    %10 = vsyncpa %s9, 0
    %11 = vsyncpa [#allocation5], 0
    %s12 = scalar_lea.sflag [#allocation5], 1
    %13 = vsyncpa %s12, 0
    loop: start=0, step=1, limit=4
    $region2: #{tpu_custom_call.1} parent=1 // loop_pre_header
      _
    $region3: #{tpu_custom_call.1} parent=1 // loop_header
      %s15 = sphi 0, %s19
      %p16 = scmp.ge.s32.totalorder %s15, 4
      %s25 = sphi 0, %s27
      %s28 = sphi 0, %s25
      %s29 = sphi 0, %s28
      %s45 = sphi 0, %s29
      %s49 = sphi 0, %s49
      %s51 = sphi 0, %s49
      %s52 = sphi 0, %s51
      %s66 = sphi 0, %s52
      %s70 = sphi 0, %s70
      %s72 = sphi 0, %s70
      %s73 = sphi 0, %s72
      %s87 = sphi 0, %s73
      %s93 = sphi 0, %s95
      %s96 = sphi 0, %s93
      %s97 = sphi 0, %s96
      %s113 = sphi 0, %s97
    $region4: #{tpu_custom_call.1} parent=1 // loop_header_branch
      %18 = sbr.rel (%p16) target = $region8
    $region5: #{tpu_custom_call.1} parent=1 // loop_body
      %s20 = ssub.s32 %s15, 1
      %s21 = ssub.s32 %s15, 2
      %s22 = sadd.s32 %s15, 1
      %s23 = ssub.s32 %s15, %s22
      %p24 = scmp.eq.s32.totalorder %s23, 0
      %s26 = sadd.s32 %s25, 1
      %s27 = scalar_select %p24, %s25, %s26
      %p30 = pneg %p24
      %p31 = scmp.eq.s32.totalorder %s15, 1
      %p32 = por %p30, %p31
      %p33 = scmp.ne.s32.totalorder %s25, %s28
      %p34 = scmp.eq.s32.totalorder %s15, 0
      %p35 = por %p33, %p34
      %p36 = scmp.ne.s32.totalorder %s25, %s28
      %p37 = scmp.eq.s32.totalorder %s20, 1
      %p38 = por %p36, %p37
      %p39 = scmp.ne.s32.totalorder %s28, %s29
      %p40 = scmp.eq.s32.totalorder %s20, 0
      %p41 = por %p39, %p40
      %p42 = scmp.ne.s32.totalorder %s28, %s29
      %p43 = scmp.eq.s32.totalorder %s21, 1
      %p44 = por %p42, %p43
      %p46 = scmp.ne.s32.totalorder %s29, %s45
      %p47 = scmp.eq.s32.totalorder %s21, 0
      %p48 = por %p46, %p47
      %s50 = sadd.s32 %s49, 1
      %p53 = scmp.eq.s32.totalorder %s15, 1
      %p54 = scmp.ne.s32.totalorder %s49, %s51
      %p55 = scmp.eq.s32.totalorder %s15, 0
      %p56 = por %p54, %p55
      %p57 = scmp.ne.s32.totalorder %s49, %s51
      %p58 = scmp.eq.s32.totalorder %s20, 1
      %p59 = por %p57, %p58
      %p60 = scmp.ne.s32.totalorder %s51, %s52
      %p61 = scmp.eq.s32.totalorder %s20, 0
      %p62 = por %p60, %p61
      %p63 = scmp.ne.s32.totalorder %s51, %s52
      %p64 = scmp.eq.s32.totalorder %s21, 1
      %p65 = por %p63, %p64
      %p67 = scmp.ne.s32.totalorder %s52, %s66
      %p68 = scmp.eq.s32.totalorder %s21, 0
      %p69 = por %p67, %p68
      %s71 = sadd.s32 %s70, 1
      %p74 = scmp.eq.s32.totalorder %s15, 1
      %p75 = scmp.ne.s32.totalorder %s70, %s72
      %p76 = scmp.eq.s32.totalorder %s15, 0
      %p77 = por %p75, %p76
      %p78 = scmp.ne.s32.totalorder %s70, %s72
      %p79 = scmp.eq.s32.totalorder %s20, 1
      %p80 = por %p78, %p79
      %p81 = scmp.ne.s32.totalorder %s72, %s73
      %p82 = scmp.eq.s32.totalorder %s20, 0
      %p83 = por %p81, %p82
      %p84 = scmp.ne.s32.totalorder %s72, %s73
      %p85 = scmp.eq.s32.totalorder %s21, 1
      %p86 = por %p84, %p85
      %p88 = scmp.ne.s32.totalorder %s73, %s87
      %p89 = scmp.eq.s32.totalorder %s21, 0
      %p90 = por %p88, %p89
      %s91 = ssub.s32 %s15, %s22
      %p92 = scmp.eq.s32.totalorder %s91, 0
      %s94 = sadd.s32 %s93, 1
      %s95 = scalar_select %p92, %s93, %s94
      %p98 = pneg %p92
      %p99 = scmp.eq.s32.totalorder %s15, 1
      %p100 = por %p98, %p99
      %p101 = scmp.ne.s32.totalorder %s93, %s96
      %p102 = scmp.eq.s32.totalorder %s15, 0
      %p103 = por %p101, %p102
      %p104 = scmp.ne.s32.totalorder %s93, %s96
      %p105 = scmp.eq.s32.totalorder %s20, 1
      %p106 = por %p104, %p105
      %p107 = scmp.ne.s32.totalorder %s96, %s97
      %p108 = scmp.eq.s32.totalorder %s20, 0
      %p109 = por %p107, %p108
      %p110 = scmp.ne.s32.totalorder %s96, %s97
      %p111 = scmp.eq.s32.totalorder %s21, 1
      %p112 = por %p110, %p111
      %p114 = scmp.ne.s32.totalorder %s97, %s113
      %p115 = scmp.eq.s32.totalorder %s21, 0
      %p116 = por %p114, %p115
      %p117 = scmp.le.s32.totalorder 1, %s15
      %p118 = scmp.lt.s32.totalorder %s15, 3
      %p119 = pnand %p117, %p118
      %p120 = pneg %p119
      // Predicated region
      $region9: #{tpu_custom_call.1} parent=5 // pred_check
        _
      $region10: #{tpu_custom_call.1} parent=5 // pred_check_branch
        %122 = sbr.rel (%p119) target = $region12
      $region11: #{tpu_custom_call.1} parent=5 // pred_region
        %s123 = ssub.s32 %s15, 1
        // Predicated region
        $region13: #{tpu_custom_call.1} parent=11 // pred_check
          %p124 = pneg %p62
        $region14: #{tpu_custom_call.1} parent=11 // pred_check_branch
          %126 = sbr.rel (%p124) target = $region16
        $region15: #{tpu_custom_call.1} parent=11 // pred_region
          _
        $region16: #{tpu_custom_call.1} parent=11 // pred_fallthru
          _
        // Predicated region
        $region17: #{tpu_custom_call.1} parent=11 // pred_check
          %p127 = pneg %p83
        $region18: #{tpu_custom_call.1} parent=11 // pred_check_branch
          %129 = sbr.rel (%p127) target = $region20
        $region19: #{tpu_custom_call.1} parent=11 // pred_region
          _
        $region20: #{tpu_custom_call.1} parent=11 // pred_fallthru
          _
      $region12: #{tpu_custom_call.1} parent=5 // pred_fallthru
        _
      %p130 = scmp.lt.s32.totalorder %s15, 2
      // Predicated region
      $region21: #{tpu_custom_call.1} parent=5 // pred_check
        %p131 = pneg %p130
      $region22: #{tpu_custom_call.1} parent=5 // pred_check_branch
        %133 = sbr.rel (%p131) target = $region24
      $region23: #{tpu_custom_call.1} parent=5 // pred_region
        // Predicated region
        $region25: #{tpu_custom_call.1} parent=23 // pred_check
          %p134 = pneg %p35
        $region26: #{tpu_custom_call.1} parent=23 // pred_check_branch
          %136 = sbr.rel (%p134) target = $region28
        $region27: #{tpu_custom_call.1} parent=23 // pred_region
          %s137 = sand.u32 %s25, 1
          %s138 = scalar_lea.sflag [#allocation4], %s137
          %s139 = sand.u32 %s25, 1
          %s140 = smul.addr %s139, 8
          %s141 = scalar_lea.vmem [#allocation3], %s140
          %s143 = ssub.s32 128, 128
          %144 = vsyncadd %s138, %s143
          %s145 = smul.addr %s15, 2
          %s146 = smul.addr %s145, 64
          %s147 = scalar_lea.hbm %s0, %s146
          %s149 = sshll.u32 %s141, 4
          %s150 = int_to_ptr.vmem [resolvable:$true] %s149
          %152 = dma.hbm_to_vmem [thread:$0]  %s147, 128, %s150, %s138
        $region28: #{tpu_custom_call.1} parent=23 // pred_fallthru
          _
      $region24: #{tpu_custom_call.1} parent=5 // pred_fallthru
        _
      %p153 = scmp.le.s32.totalorder 1, %s15
      %p154 = scmp.lt.s32.totalorder %s15, 3
      %p155 = pnand %p153, %p154
      %p156 = pneg %p155
      // Predicated region
      $region29: #{tpu_custom_call.1} parent=5 // pred_check
        _
      $region30: #{tpu_custom_call.1} parent=5 // pred_check_branch
        %158 = sbr.rel (%p155) target = $region32
      $region31: #{tpu_custom_call.1} parent=5 // pred_region
        %s159 = ssub.s32 %s15, 1
        %s160 = sand.u32 %s28, 1
        %s161 = scalar_lea.sflag [#allocation4], %s160
        %s162 = sand.u32 %s28, 1
        %s163 = smul.addr %s162, 8
        %s164 = scalar_lea.vmem [#allocation3], %s163
        // Predicated region
        $region33: #{tpu_custom_call.1} parent=31 // pred_check
          %p165 = pneg %p41
        $region34: #{tpu_custom_call.1} parent=31 // pred_check_branch
          %167 = sbr.rel (%p165) target = $region36
        $region35: #{tpu_custom_call.1} parent=31 // pred_region
          %168 = dma.done %s161, 128
        $region36: #{tpu_custom_call.1} parent=31 // pred_fallthru
          _
        %s169 = sand.u32 %s28, 1
        %s170 = scalar_lea.sflag [#allocation4], %s169
        %s171 = sand.u32 %s28, 1
        %s172 = smul.addr %s171, 8
        %s173 = scalar_lea.vmem [#allocation3], %s172
        %p174 = pneg %p41
        %p175 = pneg %p38
        %p176 = pneg %p62
        %p177 = pneg %p59
        %p178 = pneg %p83
        %p179 = pneg %p80
        %p180 = pneg %p109
        %p181 = pneg %p106
        %s182 = sand.u32 %s96, 1
        %s183 = scalar_lea.sflag [#allocation5], %s182
        %s184 = sand.u32 %s96, 1
        %s185 = smul.addr %s184, 16
        %s186 = scalar_lea.vmem [#allocation6], %s185
        %v187 = vld [vmem:[%s164] sm:$0xff]
        %v188 = vlaneseq
        %v189 = vand.u32 %v188, 127
        %v190 = vadd.s32 %v189, 128
        %vm191 = vcmp.lt.s32.totalorder %v189, 0
        %v192 = vsub.s32 0, %v189
        %v193 = vsel %vm191, %v192, %v189
        %v194 = vshrl.u32 %v193, 4
        %v195 = vand.u32 %v193, 15
        %v196 = vsub.s32 0, %v195
        %v197 = vsel %vm191, %v196, %v195
        %vm198 = vcmp.lt.s32.totalorder %v190, 0
        %v199 = vsub.s32 0, %v190
        %v200 = vsel %vm198, %v199, %v190
        %v201 = vshrl.u32 %v200, 4
        %v202 = vand.u32 %v200, 15
        %v203 = vsub.s32 0, %v202
        %v204 = vsel %vm198, %v203, %v202
        %vm205 = vcmp.ne.s32.totalorder %v197, 0
        %vm206 = vcmp.ne.s32.totalorder %v204, 0
        %vm207 = vcmp.lt.s32.totalorder %v197, 0
        %vm208 = vcmp.lt.s32.totalorder %v204, 0
        %vm209 = vmand %vm207, %vm205
        %vm210 = vmand %vm208, %vm206
        %v211 = vadd.s32 %v197, 16
        %v212 = vadd.s32 %v204, 16
        %v213 = vsel %vm209, %v211, %v197
        %v214 = vsel %vm210, %v212, %v204
        %v216 = vcombine.high %v187, %v187
        %218 = vrot.lane.b32.xlu0 %v187, 17
        %v219 = vpop.permute.xlu0 %218
        %220 = vrot.lane.b32.xlu0 %v216, 17
        %v221 = vpop.permute.xlu0 %220
        %vm222 = vcmp.lt.s32.totalorder %v189, 17
        %v223 = vsel %vm222, %v219, %v221
        %v224 = vsel %vm222, %v221, %v219
        %v225 = vadd.s32 %v189, 4294967279
        %v226 = vadd.s32 %v190, 4294967279
        %vm227 = vcmp.ge.s32.totalorder %v225, 0
        %vm228 = vcmp.ge.s32.totalorder %v226, 0
        %vm229 = vcmp.lt.s32.totalorder %v225, 256
        %vm230 = vcmp.lt.s32.totalorder %v226, 256
        %vm231 = vmand %vm227, %vm229
        %vm232 = vmand %vm228, %vm230
        %vm233 = vcmp.ge.s32.totalorder %v213, 1
        %vm234 = vcmp.ge.s32.totalorder %v214, 1
        %vm235 = vmand %vm231, %vm233
        %vm236 = vmand %vm232, %vm234
        %v237 = vsel %vm235, %v224, 0.0
        %v238 = vsel %vm236, %v223, 0.0
        %239 = vst [vmem:[#allocation2] sm:$0xf] %v237
        %240 = vst [vmem:[#allocation2 + $0x8] sm:$0xf] %v238
        %241 = vrot.lane.b32.xlu0 %v187, 16
        %v242 = vpop.permute.xlu0 %241
        %243 = vrot.lane.b32.xlu0 %v216, 16
        %v244 = vpop.permute.xlu0 %243
        %vm245 = vcmp.lt.s32.totalorder %v189, 16
        %v246 = vsel %vm245, %v242, %v244
        %v247 = vsel %vm245, %v244, %v242
        %v248 = vadd.s32 %v189, 4294967280
        %v249 = vadd.s32 %v190, 4294967280
        %vm250 = vcmp.ge.s32.totalorder %v248, 0
        %vm251 = vcmp.ge.s32.totalorder %v249, 0
        %vm252 = vcmp.lt.s32.totalorder %v248, 256
        %vm253 = vcmp.lt.s32.totalorder %v249, 256
        %vm254 = vmand %vm250, %vm252
        %vm255 = vmand %vm251, %vm253
        %v256 = vsel %vm254, %v247, 0.0
        %v257 = vsel %vm255, %v246, 0.0
        %v260 = vrot.slane %v256, 4
        %v261 = vrot.slane %v257, 4
        %264 = vst [vmem:[#allocation2] sm:$0xf0] %v260
        %265 = vst [vmem:[#allocation2 + $0x8] sm:$0xf0] %v261
        %266 = vrot.lane.b32.xlu0 %v187, 15
        %v267 = vpop.permute.xlu0 %266
        %268 = vrot.lane.b32.xlu0 %v216, 15
        %v269 = vpop.permute.xlu0 %268
        %vm270 = vcmp.lt.s32.totalorder %v189, 15
        %v271 = vsel %vm270, %v267, %v269
        %v272 = vsel %vm270, %v269, %v267
        %v273 = vadd.s32 %v189, 4294967281
        %v274 = vadd.s32 %v190, 4294967281
        %vm275 = vcmp.ge.s32.totalorder %v273, 0
        %vm276 = vcmp.ge.s32.totalorder %v274, 0
        %vm277 = vcmp.lt.s32.totalorder %v273, 256
        %vm278 = vcmp.lt.s32.totalorder %v274, 256
        %vm279 = vmand %vm275, %vm277
        %vm280 = vmand %vm276, %vm278
        %vm281 = vcmp.lt.s32.totalorder %v213, 15
        %vm282 = vcmp.lt.s32.totalorder %v214, 15
        %vm283 = vmand %vm279, %vm281
        %vm284 = vmand %vm280, %vm282
        %v285 = vsel %vm283, %v272, 0.0
        %v286 = vsel %vm284, %v271, 0.0
        %287 = vst [vmem:[#allocation2 + $0x10] sm:$0xf] %v285
        %288 = vst [vmem:[#allocation2 + $0x18] sm:$0xf] %v286
        %289 = vrot.lane.b32.xlu0 %v187, 1
        %v290 = vpop.permute.xlu0 %289
        %291 = vrot.lane.b32.xlu0 %v216, 1
        %v292 = vpop.permute.xlu0 %291
        %vm293 = vcmp.lt.s32.totalorder %v189, 1
        %v294 = vsel %vm293, %v290, %v292
        %v295 = vsel %vm293, %v292, %v290
        %v296 = vadd.s32 %v189, 4294967295
        %v297 = vadd.s32 %v190, 4294967295
        %vm298 = vcmp.ge.s32.totalorder %v296, 0
        %vm299 = vcmp.ge.s32.totalorder %v297, 0
        %vm300 = vcmp.lt.s32.totalorder %v296, 256
        %vm301 = vcmp.lt.s32.totalorder %v297, 256
        %vm302 = vmand %vm298, %vm300
        %vm303 = vmand %vm299, %vm301
        %vm304 = vmand %vm302, %vm233
        %vm305 = vmand %vm303, %vm234
        %v306 = vsel %vm304, %v295, 0.0
        %v307 = vsel %vm305, %v294, 0.0
        %v310 = vrot.slane %v306, 4
        %v311 = vrot.slane %v307, 4
        %314 = vst [vmem:[#allocation2 + $0x10] sm:$0xf0] %v310
        %315 = vst [vmem:[#allocation2 + $0x18] sm:$0xf0] %v311
        %316 = vst [vmem:[#allocation2 + $0x20] sm:$0xf] %v187
        %317 = vst [vmem:[#allocation2 + $0x28] sm:$0xf] %v216
        %318 = vrot.lane.b32.xlu0 %v187, 127
        %v319 = vpop.permute.xlu0 %318
        %320 = vrot.lane.b32.xlu0 %v216, 127
        %v321 = vpop.permute.xlu0 %320
        %vm322 = vcmp.lt.s32.totalorder %v189, 127
        %v323 = vsel %vm322, %v319, %v321
        %v324 = vsel %vm322, %v321, %v319
        %v325 = vadd.s32 %v189, 1
        %v326 = vadd.s32 %v190, 1
        %vm327 = vcmp.ge.s32.totalorder %v325, 0
        %vm328 = vcmp.ge.s32.totalorder %v326, 0
        %vm329 = vcmp.lt.s32.totalorder %v325, 256
        %vm330 = vcmp.lt.s32.totalorder %v326, 256
        %vm331 = vmand %vm327, %vm329
        %vm332 = vmand %vm328, %vm330
        %vm333 = vmand %vm331, %vm281
        %vm334 = vmand %vm332, %vm282
        %v335 = vsel %vm333, %v323, 0.0
        %v336 = vsel %vm334, %v324, 0.0
        %v339 = vrot.slane %v335, 4
        %v340 = vrot.slane %v336, 4
        %343 = vst [vmem:[#allocation2 + $0x20] sm:$0xf0] %v339
        %344 = vst [vmem:[#allocation2 + $0x28] sm:$0xf0] %v340
        %345 = vrot.lane.b32.xlu0 %v187, 113
        %v346 = vpop.permute.xlu0 %345
        %347 = vrot.lane.b32.xlu0 %v216, 113
        %v348 = vpop.permute.xlu0 %347
        %vm349 = vcmp.lt.s32.totalorder %v189, 113
        %v350 = vsel %vm349, %v346, %v348
        %v351 = vsel %vm349, %v348, %v346
        %v352 = vadd.s32 %v189, 15
        %v353 = vadd.s32 %v190, 15
        %vm354 = vcmp.ge.s32.totalorder %v352, 0
        %vm355 = vcmp.ge.s32.totalorder %v353, 0
        %vm356 = vcmp.lt.s32.totalorder %v352, 256
        %vm357 = vcmp.lt.s32.totalorder %v353, 256
        %vm358 = vmand %vm354, %vm356
        %vm359 = vmand %vm355, %vm357
        %vm360 = vmand %vm358, %vm233
        %vm361 = vmand %vm359, %vm234
        %v362 = vsel %vm360, %v350, 0.0
        %v363 = vsel %vm361, %v351, 0.0
        %364 = vst [vmem:[#allocation2 + $0x30] sm:$0xf] %v362
        %365 = vst [vmem:[#allocation2 + $0x38] sm:$0xf] %v363
        %366 = vrot.lane.b32.xlu0 %v187, 112
        %v367 = vpop.permute.xlu0 %366
        %368 = vrot.lane.b32.xlu0 %v216, 112
        %v369 = vpop.permute.xlu0 %368
        %vm370 = vcmp.lt.s32.totalorder %v189, 112
        %v371 = vsel %vm370, %v367, %v369
        %v372 = vsel %vm370, %v369, %v367
        %v373 = vadd.s32 %v189, 16
        %v374 = vadd.s32 %v190, 16
        %vm375 = vcmp.ge.s32.totalorder %v373, 0
        %vm376 = vcmp.ge.s32.totalorder %v374, 0
        %vm377 = vcmp.lt.s32.totalorder %v373, 256
        %vm378 = vcmp.lt.s32.totalorder %v374, 256
        %vm379 = vmand %vm375, %vm377
        %vm380 = vmand %vm376, %vm378
        %v381 = vsel %vm379, %v371, 0.0
        %v382 = vsel %vm380, %v372, 0.0
        %v385 = vrot.slane %v381, 4
        %v386 = vrot.slane %v382, 4
        %389 = vst [vmem:[#allocation2 + $0x30] sm:$0xf0] %v385
        %390 = vst [vmem:[#allocation2 + $0x38] sm:$0xf0] %v386
        %391 = vrot.lane.b32.xlu0 %v187, 111
        %v392 = vpop.permute.xlu0 %391
        %393 = vrot.lane.b32.xlu0 %v216, 111
        %v394 = vpop.permute.xlu0 %393
        %vm395 = vcmp.lt.s32.totalorder %v189, 111
        %v396 = vsel %vm395, %v392, %v394
        %v397 = vsel %vm395, %v394, %v392
        %v398 = vadd.s32 %v189, 17
        %v399 = vadd.s32 %v190, 17
        %vm400 = vcmp.ge.s32.totalorder %v398, 0
        %vm401 = vcmp.ge.s32.totalorder %v399, 0
        %vm402 = vcmp.lt.s32.totalorder %v398, 256
        %vm403 = vcmp.lt.s32.totalorder %v399, 256
        %vm404 = vmand %vm400, %vm402
        %vm405 = vmand %vm401, %vm403
        %vm406 = vmand %vm404, %vm281
        %vm407 = vmand %vm405, %vm282
        %v408 = vsel %vm406, %v396, 0.0
        %v409 = vsel %vm407, %v397, 0.0
        %410 = vst [vmem:[#allocation2 + $0x40] sm:$0xf] %v408
        %411 = vst [vmem:[#allocation2 + $0x48] sm:$0xf] %v409
        %v412 = vld [vmem:[%s1] sm:$0xff]
        %v413 = vld [vmem:[#allocation2] sm:$0xff]
        %v414 = vld [vmem:[#allocation2 + $0x8] sm:$0xff]
        %v415 = vld [vmem:[#allocation2 + $0x10] sm:$0xff]
        %v416 = vld [vmem:[#allocation2 + $0x18] sm:$0xff]
        %v417 = vld [vmem:[#allocation2 + $0x20] sm:$0xff]
        %v418 = vld [vmem:[#allocation2 + $0x28] sm:$0xff]
        %v419 = vld [vmem:[#allocation2 + $0x30] sm:$0xff]
        %v420 = vld [vmem:[#allocation2 + $0x38] sm:$0xff]
        %v421 = vld [vmem:[#allocation2 + $0x40] sm:$0xf]
        %v422 = vld [vmem:[#allocation2 + $0x48] sm:$0xf]
        %v423 = vld [vmem:[%s2] sm:$0xff]
        %425 = vset.pattern.permute.xlu0 0
        %426 = vperm.xlu0 %425, %v423
        %v427 = vpop.permute.xlu0 %426
        %vm429 = vcmask 293888
        %v431 = vsel %vm429, %v412, 0
        %vm433 = vcmask 1043456
        %v435 = vsel %vm433, %v421, 0
        %v438 = vsel %vm433, %v422, 0
        %440 = vmatprep.subr.mxu0 %v414
        %441 = vmatpush1.msra.mxu0 %v413
        %442 = vmatprep.subr.mxu0 %v416
        %443 = vmatpush1.msra.mxu0 %v415
        %444 = vmatprep.subr.mxu0 %v418
        %445 = vmatpush1.msra.mxu0 %v417
        %446 = vmatprep.subr.mxu0 %v420
        %447 = vmatpush1.msra.mxu0 %v419
        %448 = vmatprep.subr.mxu0 %v438
        %449 = vmatpush1.msra.mxu0 %v435
        %450 = vmatprep.subr.mxu0 0.0
        %451 = vmatpush1.msra.mxu0 0.0
        %452 = vmatprep.subr.mxu0 0.0
        %453 = vmatpush1.msra.mxu0 0.0
        %454 = vmatprep.subr.mxu0 0.0
        %455 = vmatpush1.msra.mxu0 0.0
        %456 = vmatprep.subr.mxu0 0.0
        %457 = vmatpush1.msra.mxu0 0.0
        %458 = vmatprep.subr.mxu0 0.0
        %459 = vmatpush1.msra.mxu0 0.0
        %460 = vmatprep.subr.mxu0 0.0
        %461 = vmatpush1.msra.mxu0 0.0
        %462 = vmatprep.subr.mxu0 0.0
        %463 = vmatpush1.msra.mxu0 0.0
        %464 = vmatprep.subr.mxu0 0.0
        %465 = vmatpush1.msra.mxu0 0.0
        %466 = vmatprep.subr.mxu0 0.0
        %467 = vmatpush1.msra.mxu0 0.0
        %468 = vmatprep.subr.mxu0 0.0
        %469 = vmatpush1.msra.mxu0 0.0
        %470 = vmatprep.subr.mxu0 0.0
        %471 = vmatpush1.msra.mxu0 0.0
        %472 = vmatprep.subr.mxu0 0.0
        %473 = vmatpush1.msra.mxu0 0.0
        %474 = vmatprep.subr.mxu0 0.0
        %475 = vmatpush1.msra.mxu0 0.0
        %476 = vmatprep.subr.mxu0 0.0
        %477 = vmatpush1.msra.mxu0 0.0
        %478 = vmatprep.subr.mxu0 0.0
        %479 = vmatpush1.msra.mxu0 0.0
        %480 = vmatprep.subr.mxu0 0.0
        %481 = vmatpush1.msra.mxu0 0.0
        %482 = vmatprep.subr.mxu0 0.0
        %483 = vmatpush1.msra.mxu0 0.0
        %484 = vmatprep.subr.mxu0 0.0
        %485 = vmatpush1.msra.mxu0 0.0
        %486 = vmatprep.subr.mxu0 0.0
        %487 = vmatpush1.msra.mxu0 0.0
        %488 = vmatprep.subr.mxu0 0.0
        %489 = vmatpush1.msra.mxu0 0.0
        %490 = vmatprep.subr.mxu0 0.0
        %491 = vmatpush1.msra.mxu0 0.0
        %492 = vmatprep.subr.mxu0 0.0
        %493 = vmatpush1.msra.mxu0 0.0
        %494 = vmatprep.subr.mxu0 0.0
        %495 = vmatpush1.msra.mxu0 0.0
        %496 = vmatprep.subr.mxu0 0.0
        %497 = vmatpush1.msra.mxu0 0.0
        %498 = vmatprep.subr.mxu0 0.0
        %499 = vmatpush1.msra.mxu0 0.0
        %500 = vmatprep.subr.mxu0 0.0
        %501 = vmatpush1.msra.mxu0 0.0
        %502 = vmatprep.subr.mxu0 0.0
        %503 = vmatpush1.msra.mxu0 0.0
        %504 = vmatprep.mubr.f32.mxu0 0.0
        %505 = vmatmul.mubr.f32.gmra.mrb[0].mxu0 %v431
        %v506 = vpop.f32.mrb[0].mxu0
        %v507 = vadd.f32 %v427, %v506
        %v508 = vpop.f32.mrb[0].mxu0
        %v509 = vadd.f32 %v427, %v508
        %510 = vdwg.mxu0
        %vm511 = vcmp.ge.f32.partialorder %v507, 0.0
        %vm512 = vcmp.ge.f32.partialorder %v509, 0.0
        %v513 = vmul.f32 %v507, 0.01
        %v514 = vmul.f32 %v509, 0.01
        %v515 = vsel %vm511, %v507, %v513
        %v516 = vsel %vm512, %v509, %v514
        %517 = vst [vmem:[%s186] sm:$0xff] %v515
        %518 = vst [vmem:[%s186 + $0x8] sm:$0xff] %v516
        %s519 = sand.u32 %s96, 1
        %s520 = scalar_lea.sflag [#allocation5], %s519
        %s521 = sand.u32 %s96, 1
        %s522 = smul.addr %s521, 16
        %s523 = scalar_lea.vmem [#allocation6], %s522
        // Predicated region
        $region37: #{tpu_custom_call.1} parent=31 // pred_check
          %p524 = pneg %p106
        $region38: #{tpu_custom_call.1} parent=31 // pred_check_branch
          %526 = sbr.rel (%p524) target = $region40
        $region39: #{tpu_custom_call.1} parent=31 // pred_region
          %s528 = ssub.s32 256, 256
          %529 = vsyncadd %s520, %s528
          %s530 = smul.addr %s20, 2
          %s531 = smul.addr %s530, 128
          %s532 = scalar_lea.hbm %s3, %s531
          %s534 = sshll.u32 %s523, 4
          %s535 = int_to_ptr.vmem [resolvable:$true] %s534
          %537 = dma.vmem_to_hbm [thread:$0]  %s535, 256, %s532, %s520
        $region40: #{tpu_custom_call.1} parent=31 // pred_fallthru
          _
      $region32: #{tpu_custom_call.1} parent=5 // pred_fallthru
        _
      %p538 = scmp.le.s32.totalorder 2, %s15
      // Predicated region
      $region41: #{tpu_custom_call.1} parent=5 // pred_check
        %p539 = pneg %p538
      $region42: #{tpu_custom_call.1} parent=5 // pred_check_branch
        %541 = sbr.rel (%p539) target = $region44
      $region43: #{tpu_custom_call.1} parent=5 // pred_region
        %s542 = ssub.s32 %s15, 2
        // Predicated region
        $region45: #{tpu_custom_call.1} parent=43 // pred_check
          %p543 = pneg %p112
        $region46: #{tpu_custom_call.1} parent=43 // pred_check_branch
          %545 = sbr.rel (%p543) target = $region48
        $region47: #{tpu_custom_call.1} parent=43 // pred_region
          %s546 = sand.u32 %s97, 1
          %s547 = scalar_lea.sflag [#allocation5], %s546
          %s548 = sand.u32 %s97, 1
          %s549 = smul.addr %s548, 16
          %s550 = scalar_lea.vmem [#allocation6], %s549
          %551 = dma.done %s547, 256
        $region48: #{tpu_custom_call.1} parent=43 // pred_fallthru
          _
      $region44: #{tpu_custom_call.1} parent=5 // pred_fallthru
        _
    $region6: #{tpu_custom_call.1} parent=1 // loop_footer
      %s19 = sadd.s32 1, %s15
    $region7: #{tpu_custom_call.1} parent=1 // loop_footer_branch
      %14 = sbr.rel target = $region3
    $region8: #{tpu_custom_call.1} parent=1 // loop_exit
      _
    %552 = vsyncpa [#allocation4], 1
    %s553 = scalar_lea.sflag [#allocation4], 1
    %554 = vsyncpa %s553, 1
    %555 = vsyncpa [#allocation5], 1
    %s556 = scalar_lea.sflag [#allocation5], 1
    %557 = vsyncpa %s556, 1

</llo_original>
